<compile_context>
chip_gen: v6e
topology: v6e:2x2x1
jax: 0.10.0
libtpu: 0.0.40
codegen_flags: <defaults>
</compile_context>

<pallas_src>
import jax
import jax.numpy as jnp
import numpy as np
from jax.experimental import pallas as pl
from jax.experimental.pallas import tpu as pltpu


def _vmem_capacity_bytes():
    try:
        return int(pltpu.get_tpu_info().vmem_capacity_bytes)
    except Exception:
        return 64 * 1024 * 1024        # conservative (v7x-sized) fallback


def _pick_row_tile(H, CinW, Cout, L4, budget_bytes):
    """Largest multiple-of-8 row tile dividing H whose double-buffered blocks
    (plus the resident expanded weight) fit the VMEM budget."""
    for th in range((H // 8) * 8, 0, -8):
        if H % th:
            continue
        need = 4 * (2 * th * CinW          # x block, double buffered
                    + 2 * Cout * th * L4   # out block, double buffered
                    + Cout * CinW * L4     # resident expanded weight
                    + Cout * L4)           # resident shift
        if need <= budget_bytes:
            return th
    # TODO(synk): ragged pl.cdiv grid + masked tail for huge / indivisible H.
    return H


def _make_kernel(cout):
    def kernel(x_ref, e_ref, s_ref, o_ref):
        # x_ref: (1, th, Cin*W)   e_ref: (Cout, Cin*W, 4W)
        # s_ref: (Cout, 4W)       o_ref: (1, Cout, th, 4W)
        xb = x_ref[0]                                               # (th, Cin*W)
        for oc in range(cout):   # small Cout: static unroll keeps everything 2-D
            y = jnp.dot(xb, e_ref[oc], preferred_element_type=jnp.float32)
            o_ref[0, oc] = jnp.maximum(y + s_ref[oc:oc + 1, :], 0.0)
    return kernel


def deconv2d_bn_forward(x, weight, bias, gamma, beta, eps=1e-5, matmul_dtype=None):
    """x: (N, Cin, H, W) f32 NCHW; weight: (Cin, Cout, kH, kW); bias/gamma/beta: (Cout,)."""
    N, Cin, H, W = x.shape
    Cin_w, Cout, kH, kW = weight.shape
    assert Cin_w == Cin and kH == 2 and kW == 2
    KK = kH * kW
    CinW = Cin * W
    L4 = KK * W                                    # = kH*W*kW = 4W output lanes / input row

    # f32 by default (matches PyTorch numerics); pass jnp.bfloat16 on v6e/v7x to
    # halve the x read stream (BN math / accumulation stay f32).
    op_dtype = jnp.float32 if matmul_dtype is None else matmul_dtype

    wf = weight.astype(jnp.float32)
    bf = bias.astype(jnp.float32)
    gf = gamma.astype(jnp.float32)
    betf = beta.astype(jnp.float32)

    # ---- BN batch statistics from Cin-sized sufficient statistics of x -------
    # (tiny XLA reduction over x; x is kH*kW*Cout/Cin smaller than the output)
    x3 = x.reshape(N, Cin, H * W).astype(jnp.float32)
    count_x = jnp.float32(N * H * W)
    S = jnp.sum(x3, axis=(0, 2))                                    # (Cin,)
    G = jnp.einsum('ncp,ndp->cd', x3, x3)                           # (Cin, Cin)
    xbar = S / count_x
    Gc = G - count_x * jnp.outer(xbar, xbar)                        # centered Gram
    w2 = wf.reshape(Cin, Cout * KK)                                 # cols r=(oc,ki,kj)
    m_r = (xbar @ w2).reshape(Cout, KK)                             # w_r . xbar
    q_r = jnp.einsum('cr,cd,dr->r', w2, Gc, w2).reshape(Cout, KK)   # w_r^T Gc w_r
    mean = jnp.mean(m_r, axis=1) + bf                               # (Cout,)
    d = m_r + bf[:, None] - mean[:, None]
    var = (jnp.sum(q_r, axis=1) + count_x * jnp.sum(d * d, axis=1)) / (KK * count_x)
    var = jnp.maximum(var, 0.0)                                     # biased variance
    scale_g = gf * jax.lax.rsqrt(var + eps)
    shift = (bf - mean) * scale_g + betf                            # bias folded in

    # ---- expanded weight E[oc][(ic,j), ki*2W+2j'+kj] = W[ic,oc,ki,kj]*(j==j') --
    eye = jnp.eye(W, dtype=jnp.float32)
    E = jnp.einsum('ioab,jJ->oijaJb', wf, eye).reshape(Cout, CinW, L4)
    E = (E * scale_g[:, None, None]).astype(op_dtype)               # BN scale pre-folded
    shift_b = jnp.broadcast_to(shift[:, None], (Cout, L4)).astype(jnp.float32)

    # ---- input rows as (N, H, Cin*W) (cheap x-sized XLA transpose, no y transpose)
    Xr = jnp.transpose(x, (0, 2, 1, 3)).reshape(N, H, CinW).astype(op_dtype)

    # ---- tile size / VMEM budget from the device capacity ---------------------
    cap = _vmem_capacity_bytes()
    th = _pick_row_tile(H, CinW, Cout, L4, budget_bytes=int(cap * 0.5))
    vmem_limit = min(int(cap * 0.8), 100 * 1024 * 1024)

    kernel = _make_kernel(Cout)
    out_r = pl.pallas_call(
        kernel,
        out_shape=jax.ShapeDtypeStruct((N, Cout, H, L4), jnp.float32),
        grid=(N, H // th),
        in_specs=[
            pl.BlockSpec((1, th, CinW), lambda n, t: (n, t, 0)),
            pl.BlockSpec((Cout, CinW, L4), lambda n, t: (0, 0, 0)),   # resident
            pl.BlockSpec((Cout, L4), lambda n, t: (0, 0)),            # resident
        ],
        out_specs=pl.BlockSpec((1, Cout, th, L4), lambda n, t: (n, 0, t, 0)),
        compiler_params=pltpu.CompilerParams(
            dimension_semantics=("parallel", "parallel"),
            vmem_limit_bytes=vmem_limit),
    )(Xr, E, shift_b)

    # Free (row-major) reshape: lane l = ki*2W + 2j + kj  ->  (2i+ki, 2j+kj).
    return out_r.reshape(N, Cout, kH * H, kW * W)


def _reference(x, weight, bias, gamma, beta, eps=1e-5):
    # pure-JAX reference of ConvTranspose2d(k=2, s=2) + BatchNorm(train) + ReLU
    N, Cin, H, W = x.shape
    Cout, kH, kW = weight.shape[1], weight.shape[2], weight.shape[3]
    y = jnp.einsum('nchw,cokl->nohkwl', x, weight)           # (N,Cout,H,kH,W,kW)
    y = y.reshape(N, Cout, H * kH, W * kW) + bias[None, :, None, None]
    mean = y.mean(axis=(0, 2, 3), keepdims=True)
    var = ((y - mean) ** 2).mean(axis=(0, 2, 3), keepdims=True)
    yn = (y - mean) * jax.lax.rsqrt(var + eps)
    yn = yn * gamma[None, :, None, None] + beta[None, :, None, None]
    return jnp.maximum(yn, 0.0)


if __name__ == "__main__":
    key = jax.random.PRNGKey(0)
    k_x, k_w, k_b, k_g, k_be = jax.random.split(key, 5)

    N, Cin, H, W = 2, 4, 16, 16
    Cout, kH, kW = 8, 2, 2

    x = jax.random.normal(k_x, (N, Cin, H, W), dtype=jnp.float32)
    # PyTorch parameter shapes: W (Cin, Cout, kH, kW), bias/gamma/beta (Cout,)
    weight = jax.random.normal(k_w, (Cin, Cout, kH, kW), dtype=jnp.float32) * 0.2
    bias = jax.random.normal(k_b, (Cout,), dtype=jnp.float32) * 0.1
    gamma = 1.0 + 0.1 * jax.random.normal(k_g, (Cout,), dtype=jnp.float32)
    beta = 0.1 * jax.random.normal(k_be, (Cout,), dtype=jnp.float32)

    out = deconv2d_bn_forward(x, weight, bias, gamma, beta)
    out = jax.block_until_ready(out)

    ref = jax.block_until_ready(_reference(x, weight, bias, gamma, beta))
    np.testing.assert_allclose(np.asarray(out), np.asarray(ref), rtol=1e-3, atol=1e-3)
    assert out.shape == (N, Cout, H * kH, W * kW)

    print("KERNEL_OK")
</pallas_src>

<mosaic_0001>
module attributes {stable_mosaic.version = 11 : i64} {
  func.func @kernel(%arg0: i32, %arg1: i32, %arg2: memref<1x16x64xf32, #tpu.memory_space<vmem>>, %arg3: memref<8x64x64xf32, #tpu.memory_space<vmem>>, %arg4: memref<8x64xf32, #tpu.memory_space<vmem>>, %arg5: memref<1x8x16x64xf32, #tpu.memory_space<vmem>>) attributes {dimension_semantics = [#tpu.dimension_semantics<parallel>, #tpu.dimension_semantics<parallel>], iteration_bounds = array<i64: 2, 1>, scalar_prefetch = 0 : i64, scratch_operands = 0 : i64, tpu.core_type = #tpu.core_type<tc>, window_params = [{transform_indices = @transform_0, window_bounds = array<i64: 1, 16, 64>}, {pipeline_mode = #tpu.pipeline_mode<synchronous>, transform_indices = @transform_1, window_bounds = array<i64: 8, 64, 64>}, {pipeline_mode = #tpu.pipeline_mode<synchronous>, transform_indices = @transform_2, window_bounds = array<i64: 8, 64>}, {transform_indices = @transform_3, window_bounds = array<i64: 1, 8, 16, 64>}]} {
    %c0 = arith.constant 0 : index
    %c0_0 = arith.constant 0 : index
    %c0_1 = arith.constant 0 : index
    %0 = vector.load %arg2[%c0, %c0_0, %c0_1] : memref<1x16x64xf32, #tpu.memory_space<vmem>>, vector<1x16x64xf32>
    %1 = vector.shape_cast %0 : vector<1x16x64xf32> to vector<16x64xf32>
    %c0_2 = arith.constant 0 : index
    %c0_3 = arith.constant 0 : index
    %c0_4 = arith.constant 0 : index
    %2 = vector.load %arg3[%c0_2, %c0_3, %c0_4] : memref<8x64x64xf32, #tpu.memory_space<vmem>>, vector<1x64x64xf32>
    %3 = vector.shape_cast %2 : vector<1x64x64xf32> to vector<64x64xf32>
    %cst = arith.constant dense<0.000000e+00> : vector<16x64xf32>
    %4 = tpu.matmul %1, %3, %cst {dimension_numbers = #tpu.dot_dimension_numbers<[1], [0], [0], [1], [0, 0, 1, 1], [], []>} : vector<16x64xf32>, vector<64x64xf32>, vector<16x64xf32> -> vector<16x64xf32>
    %c0_5 = arith.constant 0 : index
    %c0_6 = arith.constant 0 : index
    %5 = vector.load %arg4[%c0_5, %c0_6] : memref<8x64xf32, #tpu.memory_space<vmem>>, vector<1x64xf32>
    %6 = vector.broadcast %5 : vector<1x64xf32> to vector<16x64xf32>
    %7 = arith.addf %4, %6 : vector<16x64xf32>
    %cst_7 = arith.constant 0.000000e+00 : f32
    %8 = vector.broadcast %cst_7 : f32 to vector<16x64xf32>
    %9 = arith.maximumf %7, %8 : vector<16x64xf32>
    %c0_8 = arith.constant 0 : index
    %c0_9 = arith.constant 0 : index
    %c0_10 = arith.constant 0 : index
    %c0_11 = arith.constant 0 : index
    %10 = vector.load %arg5[%c0_8, %c0_9, %c0_10, %c0_11] : memref<1x8x16x64xf32, #tpu.memory_space<vmem>>, vector<1x1x16x64xf32>
    %11 = vector.shape_cast %10 : vector<1x1x16x64xf32> to vector<16x64xf32>
    %12 = vector.shape_cast %9 : vector<16x64xf32> to vector<1x1x16x64xf32>
    tpu.vector_store %arg5[%c0_8, %c0_9, %c0_10, %c0_11], %12 {strides = array<i32>} : memref<1x8x16x64xf32, #tpu.memory_space<vmem>>, vector<1x1x16x64xf32>,
    %c1 = arith.constant 1 : index
    %c0_12 = arith.constant 0 : index
    %c0_13 = arith.constant 0 : index
    %13 = vector.load %arg3[%c1, %c0_12, %c0_13] : memref<8x64x64xf32, #tpu.memory_space<vmem>>, vector<1x64x64xf32>
    %14 = vector.shape_cast %13 : vector<1x64x64xf32> to vector<64x64xf32>
    %cst_14 = arith.constant dense<0.000000e+00> : vector<16x64xf32>
    %15 = tpu.matmul %1, %14, %cst_14 {dimension_numbers = #tpu.dot_dimension_numbers<[1], [0], [0], [1], [0, 0, 1, 1], [], []>} : vector<16x64xf32>, vector<64x64xf32>, vector<16x64xf32> -> vector<16x64xf32>
    %c1_15 = arith.constant 1 : index
    %c0_16 = arith.constant 0 : index
    %16 = vector.load %arg4[%c1_15, %c0_16] : memref<8x64xf32, #tpu.memory_space<vmem>>, vector<1x64xf32>
    %17 = vector.broadcast %16 : vector<1x64xf32> to vector<16x64xf32>
    %18 = arith.addf %15, %17 : vector<16x64xf32>
    %cst_17 = arith.constant 0.000000e+00 : f32
    %19 = vector.broadcast %cst_17 : f32 to vector<16x64xf32>
    %20 = arith.maximumf %18, %19 : vector<16x64xf32>
    %c0_18 = arith.constant 0 : index
    %c1_19 = arith.constant 1 : index
    %c0_20 = arith.constant 0 : index
    %c0_21 = arith.constant 0 : index
    %21 = vector.load %arg5[%c0_18, %c1_19, %c0_20, %c0_21] : memref<1x8x16x64xf32, #tpu.memory_space<vmem>>, vector<1x1x16x64xf32>
    %22 = vector.shape_cast %21 : vector<1x1x16x64xf32> to vector<16x64xf32>
    %23 = vector.shape_cast %20 : vector<16x64xf32> to vector<1x1x16x64xf32>
    tpu.vector_store %arg5[%c0_18, %c1_19, %c0_20, %c0_21], %23 {strides = array<i32>} : memref<1x8x16x64xf32, #tpu.memory_space<vmem>>, vector<1x1x16x64xf32>,
    %c2 = arith.constant 2 : index
    %c0_22 = arith.constant 0 : index
    %c0_23 = arith.constant 0 : index
    %24 = vector.load %arg3[%c2, %c0_22, %c0_23] : memref<8x64x64xf32, #tpu.memory_space<vmem>>, vector<1x64x64xf32>
    %25 = vector.shape_cast %24 : vector<1x64x64xf32> to vector<64x64xf32>
    %cst_24 = arith.constant dense<0.000000e+00> : vector<16x64xf32>
    %26 = tpu.matmul %1, %25, %cst_24 {dimension_numbers = #tpu.dot_dimension_numbers<[1], [0], [0], [1], [0, 0, 1, 1], [], []>} : vector<16x64xf32>, vector<64x64xf32>, vector<16x64xf32> -> vector<16x64xf32>
    %c2_25 = arith.constant 2 : index
    %c0_26 = arith.constant 0 : index
    %27 = vector.load %arg4[%c2_25, %c0_26] : memref<8x64xf32, #tpu.memory_space<vmem>>, vector<1x64xf32>
    %28 = vector.broadcast %27 : vector<1x64xf32> to vector<16x64xf32>
    %29 = arith.addf %26, %28 : vector<16x64xf32>
    %cst_27 = arith.constant 0.000000e+00 : f32
    %30 = vector.broadcast %cst_27 : f32 to vector<16x64xf32>
    %31 = arith.maximumf %29, %30 : vector<16x64xf32>
    %c0_28 = arith.constant 0 : index
    %c2_29 = arith.constant 2 : index
    %c0_30 = arith.constant 0 : index
    %c0_31 = arith.constant 0 : index
    %32 = vector.load %arg5[%c0_28, %c2_29, %c0_30, %c0_31] : memref<1x8x16x64xf32, #tpu.memory_space<vmem>>, vector<1x1x16x64xf32>
    %33 = vector.shape_cast %32 : vector<1x1x16x64xf32> to vector<16x64xf32>
    %34 = vector.shape_cast %31 : vector<16x64xf32> to vector<1x1x16x64xf32>
    tpu.vector_store %arg5[%c0_28, %c2_29, %c0_30, %c0_31], %34 {strides = array<i32>} : memref<1x8x16x64xf32, #tpu.memory_space<vmem>>, vector<1x1x16x64xf32>,
    %c3 = arith.constant 3 : index
    %c0_32 = arith.constant 0 : index
    %c0_33 = arith.constant 0 : index
    %35 = vector.load %arg3[%c3, %c0_32, %c0_33] : memref<8x64x64xf32, #tpu.memory_space<vmem>>, vector<1x64x64xf32>
    %36 = vector.shape_cast %35 : vector<1x64x64xf32> to vector<64x64xf32>
    %cst_34 = arith.constant dense<0.000000e+00> : vector<16x64xf32>
    %37 = tpu.matmul %1, %36, %cst_34 {dimension_numbers = #tpu.dot_dimension_numbers<[1], [0], [0], [1], [0, 0, 1, 1], [], []>} : vector<16x64xf32>, vector<64x64xf32>, vector<16x64xf32> -> vector<16x64xf32>
    %c3_35 = arith.constant 3 : index
    %c0_36 = arith.constant 0 : index
    %38 = vector.load %arg4[%c3_35, %c0_36] : memref<8x64xf32, #tpu.memory_space<vmem>>, vector<1x64xf32>
    %39 = vector.broadcast %38 : vector<1x64xf32> to vector<16x64xf32>
    %40 = arith.addf %37, %39 : vector<16x64xf32>
    %cst_37 = arith.constant 0.000000e+00 : f32
    %41 = vector.broadcast %cst_37 : f32 to vector<16x64xf32>
    %42 = arith.maximumf %40, %41 : vector<16x64xf32>
    %c0_38 = arith.constant 0 : index
    %c3_39 = arith.constant 3 : index
    %c0_40 = arith.constant 0 : index
    %c0_41 = arith.constant 0 : index
    %43 = vector.load %arg5[%c0_38, %c3_39, %c0_40, %c0_41] : memref<1x8x16x64xf32, #tpu.memory_space<vmem>>, vector<1x1x16x64xf32>
    %44 = vector.shape_cast %43 : vector<1x1x16x64xf32> to vector<16x64xf32>
    %45 = vector.shape_cast %42 : vector<16x64xf32> to vector<1x1x16x64xf32>
    tpu.vector_store %arg5[%c0_38, %c3_39, %c0_40, %c0_41], %45 {strides = array<i32>} : memref<1x8x16x64xf32, #tpu.memory_space<vmem>>, vector<1x1x16x64xf32>,
    %c4 = arith.constant 4 : index
    %c0_42 = arith.constant 0 : index
    %c0_43 = arith.constant 0 : index
    %46 = vector.load %arg3[%c4, %c0_42, %c0_43] : memref<8x64x64xf32, #tpu.memory_space<vmem>>, vector<1x64x64xf32>
    %47 = vector.shape_cast %46 : vector<1x64x64xf32> to vector<64x64xf32>
    %cst_44 = arith.constant dense<0.000000e+00> : vector<16x64xf32>
    %48 = tpu.matmul %1, %47, %cst_44 {dimension_numbers = #tpu.dot_dimension_numbers<[1], [0], [0], [1], [0, 0, 1, 1], [], []>} : vector<16x64xf32>, vector<64x64xf32>, vector<16x64xf32> -> vector<16x64xf32>
    %c4_45 = arith.constant 4 : index
    %c0_46 = arith.constant 0 : index
    %49 = vector.load %arg4[%c4_45, %c0_46] : memref<8x64xf32, #tpu.memory_space<vmem>>, vector<1x64xf32>
    %50 = vector.broadcast %49 : vector<1x64xf32> to vector<16x64xf32>
    %51 = arith.addf %48, %50 : vector<16x64xf32>
    %cst_47 = arith.constant 0.000000e+00 : f32
    %52 = vector.broadcast %cst_47 : f32 to vector<16x64xf32>
    %53 = arith.maximumf %51, %52 : vector<16x64xf32>
    %c0_48 = arith.constant 0 : index
    %c4_49 = arith.constant 4 : index
    %c0_50 = arith.constant 0 : index
    %c0_51 = arith.constant 0 : index
    %54 = vector.load %arg5[%c0_48, %c4_49, %c0_50, %c0_51] : memref<1x8x16x64xf32, #tpu.memory_space<vmem>>, vector<1x1x16x64xf32>
    %55 = vector.shape_cast %54 : vector<1x1x16x64xf32> to vector<16x64xf32>
    %56 = vector.shape_cast %53 : vector<16x64xf32> to vector<1x1x16x64xf32>
    tpu.vector_store %arg5[%c0_48, %c4_49, %c0_50, %c0_51], %56 {strides = array<i32>} : memref<1x8x16x64xf32, #tpu.memory_space<vmem>>, vector<1x1x16x64xf32>,
    %c5 = arith.constant 5 : index
    %c0_52 = arith.constant 0 : index
    %c0_53 = arith.constant 0 : index
    %57 = vector.load %arg3[%c5, %c0_52, %c0_53] : memref<8x64x64xf32, #tpu.memory_space<vmem>>, vector<1x64x64xf32>
    %58 = vector.shape_cast %57 : vector<1x64x64xf32> to vector<64x64xf32>
    %cst_54 = arith.constant dense<0.000000e+00> : vector<16x64xf32>
    %59 = tpu.matmul %1, %58, %cst_54 {dimension_numbers = #tpu.dot_dimension_numbers<[1], [0], [0], [1], [0, 0, 1, 1], [], []>} : vector<16x64xf32>, vector<64x64xf32>, vector<16x64xf32> -> vector<16x64xf32>
    %c5_55 = arith.constant 5 : index
    %c0_56 = arith.constant 0 : index
    %60 = vector.load %arg4[%c5_55, %c0_56] : memref<8x64xf32, #tpu.memory_space<vmem>>, vector<1x64xf32>
    %61 = vector.broadcast %60 : vector<1x64xf32> to vector<16x64xf32>
    %62 = arith.addf %59, %61 : vector<16x64xf32>
    %cst_57 = arith.constant 0.000000e+00 : f32
    %63 = vector.broadcast %cst_57 : f32 to vector<16x64xf32>
    %64 = arith.maximumf %62, %63 : vector<16x64xf32>
    %c0_58 = arith.constant 0 : index
    %c5_59 = arith.constant 5 : index
    %c0_60 = arith.constant 0 : index
    %c0_61 = arith.constant 0 : index
    %65 = vector.load %arg5[%c0_58, %c5_59, %c0_60, %c0_61] : memref<1x8x16x64xf32, #tpu.memory_space<vmem>>, vector<1x1x16x64xf32>
    %66 = vector.shape_cast %65 : vector<1x1x16x64xf32> to vector<16x64xf32>
    %67 = vector.shape_cast %64 : vector<16x64xf32> to vector<1x1x16x64xf32>
    tpu.vector_store %arg5[%c0_58, %c5_59, %c0_60, %c0_61], %67 {strides = array<i32>} : memref<1x8x16x64xf32, #tpu.memory_space<vmem>>, vector<1x1x16x64xf32>,
    %c6 = arith.constant 6 : index
    %c0_62 = arith.constant 0 : index
    %c0_63 = arith.constant 0 : index
    %68 = vector.load %arg3[%c6, %c0_62, %c0_63] : memref<8x64x64xf32, #tpu.memory_space<vmem>>, vector<1x64x64xf32>
    %69 = vector.shape_cast %68 : vector<1x64x64xf32> to vector<64x64xf32>
    %cst_64 = arith.constant dense<0.000000e+00> : vector<16x64xf32>
    %70 = tpu.matmul %1, %69, %cst_64 {dimension_numbers = #tpu.dot_dimension_numbers<[1], [0], [0], [1], [0, 0, 1, 1], [], []>} : vector<16x64xf32>, vector<64x64xf32>, vector<16x64xf32> -> vector<16x64xf32>
    %c6_65 = arith.constant 6 : index
    %c0_66 = arith.constant 0 : index
    %71 = vector.load %arg4[%c6_65, %c0_66] : memref<8x64xf32, #tpu.memory_space<vmem>>, vector<1x64xf32>
    %72 = vector.broadcast %71 : vector<1x64xf32> to vector<16x64xf32>
    %73 = arith.addf %70, %72 : vector<16x64xf32>
    %cst_67 = arith.constant 0.000000e+00 : f32
    %74 = vector.broadcast %cst_67 : f32 to vector<16x64xf32>
    %75 = arith.maximumf %73, %74 : vector<16x64xf32>
    %c0_68 = arith.constant 0 : index
    %c6_69 = arith.constant 6 : index
    %c0_70 = arith.constant 0 : index
    %c0_71 = arith.constant 0 : index
    %76 = vector.load %arg5[%c0_68, %c6_69, %c0_70, %c0_71] : memref<1x8x16x64xf32, #tpu.memory_space<vmem>>, vector<1x1x16x64xf32>
    %77 = vector.shape_cast %76 : vector<1x1x16x64xf32> to vector<16x64xf32>
    %78 = vector.shape_cast %75 : vector<16x64xf32> to vector<1x1x16x64xf32>
    tpu.vector_store %arg5[%c0_68, %c6_69, %c0_70, %c0_71], %78 {strides = array<i32>} : memref<1x8x16x64xf32, #tpu.memory_space<vmem>>, vector<1x1x16x64xf32>,
    %c7 = arith.constant 7 : index
    %c0_72 = arith.constant 0 : index
    %c0_73 = arith.constant 0 : index
    %79 = vector.load %arg3[%c7, %c0_72, %c0_73] : memref<8x64x64xf32, #tpu.memory_space<vmem>>, vector<1x64x64xf32>
    %80 = vector.shape_cast %79 : vector<1x64x64xf32> to vector<64x64xf32>
    %cst_74 = arith.constant dense<0.000000e+00> : vector<16x64xf32>
    %81 = tpu.matmul %1, %80, %cst_74 {dimension_numbers = #tpu.dot_dimension_numbers<[1], [0], [0], [1], [0, 0, 1, 1], [], []>} : vector<16x64xf32>, vector<64x64xf32>, vector<16x64xf32> -> vector<16x64xf32>
    %c7_75 = arith.constant 7 : index
    %c0_76 = arith.constant 0 : index
    %82 = vector.load %arg4[%c7_75, %c0_76] : memref<8x64xf32, #tpu.memory_space<vmem>>, vector<1x64xf32>
    %83 = vector.broadcast %82 : vector<1x64xf32> to vector<16x64xf32>
    %84 = arith.addf %81, %83 : vector<16x64xf32>
    %cst_77 = arith.constant 0.000000e+00 : f32
    %85 = vector.broadcast %cst_77 : f32 to vector<16x64xf32>
    %86 = arith.maximumf %84, %85 : vector<16x64xf32>
    %c0_78 = arith.constant 0 : index
    %c7_79 = arith.constant 7 : index
    %c0_80 = arith.constant 0 : index
    %c0_81 = arith.constant 0 : index
    %87 = vector.load %arg5[%c0_78, %c7_79, %c0_80, %c0_81] : memref<1x8x16x64xf32, #tpu.memory_space<vmem>>, vector<1x1x16x64xf32>
    %88 = vector.shape_cast %87 : vector<1x1x16x64xf32> to vector<16x64xf32>
    %89 = vector.shape_cast %86 : vector<16x64xf32> to vector<1x1x16x64xf32>
    tpu.vector_store %arg5[%c0_78, %c7_79, %c0_80, %c0_81], %89 {strides = array<i32>} : memref<1x8x16x64xf32, #tpu.memory_space<vmem>>, vector<1x1x16x64xf32>,
    return
  }
  func.func @transform_0(%arg0: i32, %arg1: i32) -> (i32, i32, i32) {
    %c0_i32 = arith.constant 0 : i32
    %c0_i32_0 = arith.constant 0 : i32
    return %arg0, %arg1, %c0_i32 : i32, i32, i32
  }
  func.func @transform_1(%arg0: i32, %arg1: i32) -> (i32, i32, i32) {
    %c0_i32 = arith.constant 0 : i32
    %c0_i32_0 = arith.constant 0 : i32
    %c0_i32_1 = arith.constant 0 : i32
    %c0_i32_2 = arith.constant 0 : i32
    return %c0_i32, %c0_i32_0, %c0_i32_1 : i32, i32, i32
  }
  func.func @transform_2(%arg0: i32, %arg1: i32) -> (i32, i32) {
    %c0_i32 = arith.constant 0 : i32
    %c0_i32_0 = arith.constant 0 : i32
    %c0_i32_1 = arith.constant 0 : i32
    return %c0_i32, %c0_i32_0 : i32, i32
  }
  func.func @transform_3(%arg0: i32, %arg1: i32) -> (i32, i32, i32, i32) {
    %c0_i32 = arith.constant 0 : i32
    %c0_i32_0 = arith.constant 0 : i32
    %c0_i32_1 = arith.constant 0 : i32
    return %arg0, %c0_i32, %arg1, %c0_i32_0 : i32, i32, i32, i32
  }
}

</mosaic_0001>

<llo_original>
// kernel: tpu_custom_call.1
$region0: #{tpu_custom_call.1}
  #allocation0 [shape = 'u32[]', space=smem, size = 0x4, offset = 0x4, fixed_abs, tag = 'smem constant byte address 0x4 - core index']
  #allocation1 [shape = 'u32[144,128]{1,0:T(1,128)}', space=vmem, size = 0x12000, scoped, tag = 'internal scratch']
  %s0 = inlined_call_operand.hbm [shape: f32[2,16,64], index: 0, kind: input, shape index: {}]
  %s1 = inlined_call_operand.hbm [shape: f32[8,64,64], index: 1, kind: input, shape index: {}]
  %s2 = inlined_call_operand.hbm [shape: f32[8,64], index: 2, kind: input, shape index: {}]
  %s3 = inlined_call_operand.hbm [shape: f32[2,8,16,64], index: 3, kind: output, shape index: {}]
  %s4 = sld [smem:[#allocation0]]
  $region57: #{tpu_custom_call.1} parent=0
    _
  %s6 = ssub.s32 1, %s4
  %s7 = scalar_select 0, %s6, %s4
  $region1: #{tpu_custom_call.1} parent=0
    #allocation2 [shape = 'u8[16384]{0}', space=vmem, size = 0x4000, scoped, tag = 'input window, operand 0']
    #allocation3 [shape = 's32[2]{0}', space=sflag, size = 0x8, scoped, tag = 'scoped memory for tpu_custom_call.1']
    #allocation4 [shape = 's32[2]{0}', space=sflag, size = 0x8, scoped, tag = 'scoped memory for tpu_custom_call.1']
    #allocation5 [shape = 'u8[262144]{0}', space=vmem, size = 0x40000, scoped, tag = 'input window, operand 1, single buffered']
    #allocation6 [shape = 's32[1]{0}', space=sflag, size = 0x4, scoped, tag = 'scoped memory for tpu_custom_call.1']
    #allocation7 [shape = 'u8[4096]{0}', space=vmem, size = 0x1000, scoped, tag = 'input window, operand 2, single buffered']
    #allocation8 [shape = 'u8[131072]{0}', space=vmem, size = 0x20000, scoped, tag = 'output window, operand 0']
    %8 = vsyncpa [#allocation3], 0
    %s9 = scalar_lea.sflag [#allocation3], 1
    %10 = vsyncpa %s9, 0
    %11 = vsyncpa [#allocation6], 0
    %12 = vsyncpa [#allocation4], 0
    %s13 = scalar_lea.sflag [#allocation4], 1
    %14 = vsyncpa %s13, 0
    loop: start=0, step=1, limit=4
    $region2: #{tpu_custom_call.1} parent=1 // loop_pre_header
      _
    $region3: #{tpu_custom_call.1} parent=1 // loop_header
      %s16 = sphi 0, %s20
      %p17 = scmp.ge.s32.totalorder %s16, 4
      %s23 = sphi 0, %s35
      %s24 = sphi 0, %s31
      %s25 = sphi 0, %s23
      %s26 = sphi 0, %s24
      %s27 = sphi 0, %s25
      %s28 = sphi 0, %s26
      %s40 = sphi 0, %s42
      %s43 = sphi 0, %s40
      %s44 = sphi 0, %s43
      %s60 = sphi 0, %s44
      %s64 = sphi 0, %s64
      %s66 = sphi 0, %s64
      %s67 = sphi 0, %s66
      %s81 = sphi 0, %s67
      %s85 = sphi 0, %s85
      %s87 = sphi 0, %s85
      %s88 = sphi 0, %s87
      %s102 = sphi 0, %s88
      %s110 = sphi 0, %s112
      %s113 = sphi 0, %s110
      %s114 = sphi 0, %s113
      %s130 = sphi 0, %s114
    $region4: #{tpu_custom_call.1} parent=1 // loop_header_branch
      %19 = sbr.rel (%p17) target = $region8
    $region5: #{tpu_custom_call.1} parent=1 // loop_body
      %s21 = ssub.s32 %s16, 1
      %s22 = ssub.s32 %s16, 2
      %s29 = sadd.s32 1, %s24
      %p30 = scmp.ge.s32.totalorder %s29, 1
      %s31 = scalar_select %p30, 0, %s29
      %s32 = sadd.s32 1, %s23
      %s33 = scalar_select %p30, %s32, %s23
      %p34 = scmp.ge.s32.totalorder %s33, 2
      %s35 = scalar_select %p34, 0, %s33
      %s36 = ssub.s32 %s23, %s35
      %s37 = ssub.s32 %s24, %s31
      %s38 = sor.u32 %s36, %s37
      %p39 = scmp.eq.s32.totalorder %s38, 0
      %s41 = sadd.s32 %s40, 1
      %s42 = scalar_select %p39, %s40, %s41
      %p45 = pneg %p39
      %p46 = scmp.eq.s32.totalorder %s16, 1
      %p47 = por %p45, %p46
      %p48 = scmp.ne.s32.totalorder %s40, %s43
      %p49 = scmp.eq.s32.totalorder %s16, 0
      %p50 = por %p48, %p49
      %p51 = scmp.ne.s32.totalorder %s40, %s43
      %p52 = scmp.eq.s32.totalorder %s21, 1
      %p53 = por %p51, %p52
      %p54 = scmp.ne.s32.totalorder %s43, %s44
      %p55 = scmp.eq.s32.totalorder %s21, 0
      %p56 = por %p54, %p55
      %p57 = scmp.ne.s32.totalorder %s43, %s44
      %p58 = scmp.eq.s32.totalorder %s22, 1
      %p59 = por %p57, %p58
      %p61 = scmp.ne.s32.totalorder %s44, %s60
      %p62 = scmp.eq.s32.totalorder %s22, 0
      %p63 = por %p61, %p62
      %s65 = sadd.s32 %s64, 1
      %p68 = scmp.eq.s32.totalorder %s16, 1
      %p69 = scmp.ne.s32.totalorder %s64, %s66
      %p70 = scmp.eq.s32.totalorder %s16, 0
      %p71 = por %p69, %p70
      %p72 = scmp.ne.s32.totalorder %s64, %s66
      %p73 = scmp.eq.s32.totalorder %s21, 1
      %p74 = por %p72, %p73
      %p75 = scmp.ne.s32.totalorder %s66, %s67
      %p76 = scmp.eq.s32.totalorder %s21, 0
      %p77 = por %p75, %p76
      %p78 = scmp.ne.s32.totalorder %s66, %s67
      %p79 = scmp.eq.s32.totalorder %s22, 1
      %p80 = por %p78, %p79
      %p82 = scmp.ne.s32.totalorder %s67, %s81
      %p83 = scmp.eq.s32.totalorder %s22, 0
      %p84 = por %p82, %p83
      %s86 = sadd.s32 %s85, 1
      %p89 = scmp.eq.s32.totalorder %s16, 1
      %p90 = scmp.ne.s32.totalorder %s85, %s87
      %p91 = scmp.eq.s32.totalorder %s16, 0
      %p92 = por %p90, %p91
      %p93 = scmp.ne.s32.totalorder %s85, %s87
      %p94 = scmp.eq.s32.totalorder %s21, 1
      %p95 = por %p93, %p94
      %p96 = scmp.ne.s32.totalorder %s87, %s88
      %p97 = scmp.eq.s32.totalorder %s21, 0
      %p98 = por %p96, %p97
      %p99 = scmp.ne.s32.totalorder %s87, %s88
      %p100 = scmp.eq.s32.totalorder %s22, 1
      %p101 = por %p99, %p100
      %p103 = scmp.ne.s32.totalorder %s88, %s102
      %p104 = scmp.eq.s32.totalorder %s22, 0
      %p105 = por %p103, %p104
      %s106 = ssub.s32 %s23, %s35
      %s107 = ssub.s32 %s24, %s31
      %s108 = sor.u32 %s106, %s107
      %p109 = scmp.eq.s32.totalorder %s108, 0
      %s111 = sadd.s32 %s110, 1
      %s112 = scalar_select %p109, %s110, %s111
      %p115 = pneg %p109
      %p116 = scmp.eq.s32.totalorder %s16, 1
      %p117 = por %p115, %p116
      %p118 = scmp.ne.s32.totalorder %s110, %s113
      %p119 = scmp.eq.s32.totalorder %s16, 0
      %p120 = por %p118, %p119
      %p121 = scmp.ne.s32.totalorder %s110, %s113
      %p122 = scmp.eq.s32.totalorder %s21, 1
      %p123 = por %p121, %p122
      %p124 = scmp.ne.s32.totalorder %s113, %s114
      %p125 = scmp.eq.s32.totalorder %s21, 0
      %p126 = por %p124, %p125
      %p127 = scmp.ne.s32.totalorder %s113, %s114
      %p128 = scmp.eq.s32.totalorder %s22, 1
      %p129 = por %p127, %p128
      %p131 = scmp.ne.s32.totalorder %s114, %s130
      %p132 = scmp.eq.s32.totalorder %s22, 0
      %p133 = por %p131, %p132
      %p134 = scmp.le.s32.totalorder 1, %s16
      %p135 = scmp.lt.s32.totalorder %s16, 3
      %p136 = pnand %p134, %p135
      %p137 = pneg %p136
      // Predicated region
      $region9: #{tpu_custom_call.1} parent=5 // pred_check
        _
      $region10: #{tpu_custom_call.1} parent=5 // pred_check_branch
        %139 = sbr.rel (%p136) target = $region12
      $region11: #{tpu_custom_call.1} parent=5 // pred_region
        %s140 = ssub.s32 %s16, 1
        // Predicated region
        $region13: #{tpu_custom_call.1} parent=11 // pred_check
          %p141 = pneg %p77
        $region14: #{tpu_custom_call.1} parent=11 // pred_check_branch
          %143 = sbr.rel (%p141) target = $region16
        $region15: #{tpu_custom_call.1} parent=11 // pred_region
          %s145 = ssub.s32 8192, 8192
          %146 = vsyncadd [#allocation6], %s145
          %s147 = sshll.u32 [#allocation5], 4
          %s148 = int_to_ptr.vmem [resolvable:$true] %s147
          %153 = dma.hbm_to_vmem [thread:$0]  %s1, 8192, %s148, [#allocation6], 128, 128, 8
        $region16: #{tpu_custom_call.1} parent=11 // pred_fallthru
          _
        // Predicated region
        $region17: #{tpu_custom_call.1} parent=11 // pred_check
          %p154 = pneg %p98
        $region18: #{tpu_custom_call.1} parent=11 // pred_check_branch
          %156 = sbr.rel (%p154) target = $region20
        $region19: #{tpu_custom_call.1} parent=11 // pred_region
          %s158 = ssub.s32 128, 128
          %159 = vsyncadd [#allocation6], %s158
          %s161 = sshll.u32 [#allocation7], 4
          %s162 = int_to_ptr.vmem [resolvable:$true] %s161
          %164 = dma.hbm_to_vmem [thread:$0]  %s2, 128, %s162, [#allocation6]
        $region20: #{tpu_custom_call.1} parent=11 // pred_fallthru
          _
      $region12: #{tpu_custom_call.1} parent=5 // pred_fallthru
        _
      %p165 = scmp.lt.s32.totalorder %s16, 2
      // Predicated region
      $region21: #{tpu_custom_call.1} parent=5 // pred_check
        %p166 = pneg %p165
      $region22: #{tpu_custom_call.1} parent=5 // pred_check_branch
        %168 = sbr.rel (%p166) target = $region24
      $region23: #{tpu_custom_call.1} parent=5 // pred_region
        // Predicated region
        $region25: #{tpu_custom_call.1} parent=23 // pred_check
          %p169 = pneg %p50
        $region26: #{tpu_custom_call.1} parent=23 // pred_check_branch
          %171 = sbr.rel (%p169) target = $region28
        $region27: #{tpu_custom_call.1} parent=23 // pred_region
          %s172 = sand.u32 %s40, 1
          %s173 = scalar_lea.sflag [#allocation3], %s172
          %s174 = sand.u32 %s40, 1
          %s175 = smul.addr %s174, 16
          %s176 = scalar_lea.vmem [#allocation2], %s175
          %s177 = smul.u32 2, %s24
          %s179 = ssub.s32 256, 256
          %180 = vsyncadd %s173, %s179
          %s181 = smul.addr %s23, 2
          %s182 = sadd.s32 %s177, %s181
          %s183 = smul.addr %s182, 128
          %s184 = scalar_lea.hbm %s0, %s183
          %s185 = sshll.u32 %s176, 4
          %s186 = int_to_ptr.vmem [resolvable:$true] %s185
          %191 = dma.hbm_to_vmem [thread:$0]  %s184, 256, %s186, %s173, 128, 128, 8
        $region28: #{tpu_custom_call.1} parent=23 // pred_fallthru
          _
      $region24: #{tpu_custom_call.1} parent=5 // pred_fallthru
        _
      %p192 = scmp.le.s32.totalorder 1, %s16
      %p193 = scmp.lt.s32.totalorder %s16, 3
      %p194 = pnand %p192, %p193
      %p195 = pneg %p194
      // Predicated region
      $region29: #{tpu_custom_call.1} parent=5 // pred_check
        _
      $region30: #{tpu_custom_call.1} parent=5 // pred_check_branch
        %197 = sbr.rel (%p194) target = $region32
      $region31: #{tpu_custom_call.1} parent=5 // pred_region
        %s198 = ssub.s32 %s16, 1
        %s199 = sand.u32 %s43, 1
        %s200 = scalar_lea.sflag [#allocation3], %s199
        %s201 = sand.u32 %s43, 1
        %s202 = smul.addr %s201, 16
        %s203 = scalar_lea.vmem [#allocation2], %s202
        // Predicated region
        $region33: #{tpu_custom_call.1} parent=31 // pred_check
          %p204 = pneg %p56
        $region34: #{tpu_custom_call.1} parent=31 // pred_check_branch
          %206 = sbr.rel (%p204) target = $region36
        $region35: #{tpu_custom_call.1} parent=31 // pred_region
          %207 = dma.done %s200, 256
        $region36: #{tpu_custom_call.1} parent=31 // pred_fallthru
          _
        // Predicated region
        $region37: #{tpu_custom_call.1} parent=31 // pred_check
          %p208 = pneg %p77
        $region38: #{tpu_custom_call.1} parent=31 // pred_check_branch
          %210 = sbr.rel (%p208) target = $region40
        $region39: #{tpu_custom_call.1} parent=31 // pred_region
          %211 = dma.done [#allocation6], 8192
        $region40: #{tpu_custom_call.1} parent=31 // pred_fallthru
          _
        // Predicated region
        $region41: #{tpu_custom_call.1} parent=31 // pred_check
          %p212 = pneg %p98
        $region42: #{tpu_custom_call.1} parent=31 // pred_check_branch
          %214 = sbr.rel (%p212) target = $region44
        $region43: #{tpu_custom_call.1} parent=31 // pred_region
          %215 = dma.done [#allocation6], 128
        $region44: #{tpu_custom_call.1} parent=31 // pred_fallthru
          _
        %s216 = sand.u32 %s43, 1
        %s217 = scalar_lea.sflag [#allocation3], %s216
        %s218 = sand.u32 %s43, 1
        %s219 = smul.addr %s218, 16
        %s220 = scalar_lea.vmem [#allocation2], %s219
        %p221 = pneg %p56
        %p222 = pneg %p53
        %p223 = pneg %p77
        %p224 = pneg %p74
        %p225 = pneg %p98
        %p226 = pneg %p95
        %p227 = pneg %p126
        %p228 = pneg %p123
        %s229 = sand.u32 %s113, 1
        %s230 = scalar_lea.sflag [#allocation4], %s229
        %s231 = sand.u32 %s113, 1
        %s232 = smul.addr %s231, 128
        %s233 = scalar_lea.vmem [#allocation8], %s232
        %s234 = smul.u32 2, %s26
        %s235 = smul.u32 2, %s26
        %v236 = vld [vmem:[%s203] sm:$0xff]
        %v237 = vld [vmem:[%s203 + $0x8] sm:$0xff]
        %v238 = vld [vmem:[#allocation5] sm:$0xff]
        %v239 = vld [vmem:[#allocation5 + $0x8] sm:$0xff]
        %v240 = vld [vmem:[#allocation5 + $0x10] sm:$0xff]
        %v241 = vld [vmem:[#allocation5 + $0x18] sm:$0xff]
        %v242 = vld [vmem:[#allocation5 + $0x20] sm:$0xff]
        %v243 = vld [vmem:[#allocation5 + $0x28] sm:$0xff]
        %v244 = vld [vmem:[#allocation5 + $0x30] sm:$0xff]
        %v245 = vld [vmem:[#allocation5 + $0x38] sm:$0xff]
        %v246 = vld [vmem:[#allocation7] sm:$0x1]
        %v247 = vlaneseq
        %v248 = vshrl.u32 %v247, 7
        %v249 = vsub.s32 0, %v248
        %v250 = vrot.slane %v246, %v249
        %vm251 = vcmask 523264
        %v253 = vsel %vm251, %v236, 0
        %v256 = vsel %vm251, %v237, 0
        %258 = vmatprep.subr.mxu0 0.0
        %259 = vmatpush1.msra.mxu0 0.0
        %260 = vmatprep.subr.mxu0 0.0
        %261 = vmatpush1.msra.mxu0 0.0
        %262 = vmatprep.subr.mxu0 0.0
        %263 = vmatpush1.msra.mxu0 0.0
        %264 = vmatprep.subr.mxu0 0.0
        %265 = vmatpush1.msra.mxu0 0.0
        %266 = vmatprep.subr.mxu0 0.0
        %267 = vmatpush1.msra.mxu0 0.0
        %268 = vmatprep.subr.mxu0 0.0
        %269 = vmatpush1.msra.mxu0 0.0
        %270 = vmatprep.subr.mxu0 0.0
        %271 = vmatpush1.msra.mxu0 0.0
        %272 = vmatprep.subr.mxu0 0.0
        %273 = vmatpush1.msra.mxu0 0.0
        %274 = vmatprep.subr.mxu0 0.0
        %275 = vmatpush1.msra.mxu0 %v245
        %276 = vmatprep.subr.mxu0 0.0
        %277 = vmatpush1.msra.mxu0 %v244
        %278 = vmatprep.subr.mxu0 0.0
        %279 = vmatpush1.msra.mxu0 %v243
        %280 = vmatprep.subr.mxu0 0.0
        %281 = vmatpush1.msra.mxu0 %v242
        %282 = vmatprep.subr.mxu0 0.0
        %283 = vmatpush1.msra.mxu0 %v241
        %284 = vmatprep.subr.mxu0 0.0
        %285 = vmatpush1.msra.mxu0 %v240
        %286 = vmatprep.subr.mxu0 0.0
        %287 = vmatpush1.msra.mxu0 %v239
        %288 = vmatprep.subr.mxu0 0.0
        %289 = vmatpush1.msra.mxu0 %v238
        %290 = vmatprep.subr.mxu0 0.0
        %291 = vmatpush2.msra.mxu0 0.0
        %292 = vmatprep.subr.mxu0 0.0
        %293 = vmatpush2.msra.mxu0 0.0
        %294 = vmatprep.subr.mxu0 0.0
        %295 = vmatpush2.msra.mxu0 0.0
        %296 = vmatprep.subr.mxu0 0.0
        %297 = vmatpush2.msra.mxu0 0.0
        %298 = vmatprep.subr.mxu0 0.0
        %299 = vmatpush2.msra.mxu0 0.0
        %300 = vmatprep.subr.mxu0 0.0
        %301 = vmatpush2.msra.mxu0 0.0
        %302 = vmatprep.subr.mxu0 0.0
        %303 = vmatpush2.msra.mxu0 0.0
        %304 = vmatprep.subr.mxu0 0.0
        %305 = vmatpush2.msra.mxu0 0.0
        %306 = vmatprep.subr.mxu0 0.0
        %307 = vmatpush2.msra.mxu0 0.0
        %308 = vmatprep.subr.mxu0 0.0
        %309 = vmatpush2.msra.mxu0 0.0
        %310 = vmatprep.subr.mxu0 0.0
        %311 = vmatpush2.msra.mxu0 0.0
        %312 = vmatprep.subr.mxu0 0.0
        %313 = vmatpush2.msra.mxu0 0.0
        %314 = vmatprep.subr.mxu0 0.0
        %315 = vmatpush2.msra.mxu0 0.0
        %316 = vmatprep.subr.mxu0 0.0
        %317 = vmatpush2.msra.mxu0 0.0
        %318 = vmatprep.subr.mxu0 0.0
        %319 = vmatpush2.msra.mxu0 0.0
        %320 = vmatprep.subr.mxu0 0.0
        %321 = vmatpush2.msra.mxu0 0.0
        %322 = vmatprep.mubr.f32.mxu0 0.0
        %323 = vmatmul.mubr.f32.gmra.mxu0 %v253
        %v324 = vpop.f32.mrf.mxu0
        %v325 = vadd.f32 %v250, %v324
        %v326 = vpop.f32.mrf.mxu0
        %327 = vmatprep.mubr.f32.mxu0 0.0
        %328 = vmatmul.mubr.f32.gmra.mxu0 %v256
        %v329 = vpop.f32.mrf.mxu0
        %v330 = vadd.f32 %v250, %v329
        %v331 = vpop.f32.mrf.mxu0
        %332 = vdwg.mxu0
        %v333 = vmax.f32 %v325, 0.0
        %v334 = vmax.f32 %v330, 0.0
        %335 = vst.msk [vmem:[%s233] sm:$0xff] %vm251, %v333
        %336 = vst.msk [vmem:[%s233 + $0x8] sm:$0xff] %vm251, %v334
        %s337 = scalar_lea.vmem [#allocation5], 64
        %v338 = vld [vmem:[%s337] sm:$0xff]
        %v339 = vld [vmem:[%s337 + $0x8] sm:$0xff]
        %v340 = vld [vmem:[%s337 + $0x10] sm:$0xff]
        %v341 = vld [vmem:[%s337 + $0x18] sm:$0xff]
        %v342 = vld [vmem:[%s337 + $0x20] sm:$0xff]
        %v343 = vld [vmem:[%s337 + $0x28] sm:$0xff]
        %v344 = vld [vmem:[%s337 + $0x30] sm:$0xff]
        %v345 = vld [vmem:[%s337 + $0x38] sm:$0xff]
        %v346 = vld [vmem:[#allocation7 + $0x1] sm:$0x1]
        %v347 = vlaneseq
        %v348 = vshrl.u32 %v347, 7
        %v349 = vsub.s32 0, %v348
        %v350 = vrot.slane %v346, %v349
        %351 = vmatprep.subr.mxu0 0.0
        %352 = vmatpush1.msra.mxu0 0.0
        %353 = vmatprep.subr.mxu0 0.0
        %354 = vmatpush1.msra.mxu0 0.0
        %355 = vmatprep.subr.mxu0 0.0
        %356 = vmatpush1.msra.mxu0 0.0
        %357 = vmatprep.subr.mxu0 0.0
        %358 = vmatpush1.msra.mxu0 0.0
        %359 = vmatprep.subr.mxu0 0.0
        %360 = vmatpush1.msra.mxu0 0.0
        %361 = vmatprep.subr.mxu0 0.0
        %362 = vmatpush1.msra.mxu0 0.0
        %363 = vmatprep.subr.mxu0 0.0
        %364 = vmatpush1.msra.mxu0 0.0
        %365 = vmatprep.subr.mxu0 0.0
        %366 = vmatpush1.msra.mxu0 0.0
        %367 = vmatprep.subr.mxu0 0.0
        %368 = vmatpush1.msra.mxu0 %v345
        %369 = vmatprep.subr.mxu0 0.0
        %370 = vmatpush1.msra.mxu0 %v344
        %371 = vmatprep.subr.mxu0 0.0
        %372 = vmatpush1.msra.mxu0 %v343
        %373 = vmatprep.subr.mxu0 0.0
        %374 = vmatpush1.msra.mxu0 %v342
        %375 = vmatprep.subr.mxu0 0.0
        %376 = vmatpush1.msra.mxu0 %v341
        %377 = vmatprep.subr.mxu0 0.0
        %378 = vmatpush1.msra.mxu0 %v340
        %379 = vmatprep.subr.mxu0 0.0
        %380 = vmatpush1.msra.mxu0 %v339
        %381 = vmatprep.subr.mxu0 0.0
        %382 = vmatpush1.msra.mxu0 %v338
        %383 = vmatprep.subr.mxu0 0.0
        %384 = vmatpush2.msra.mxu0 0.0
        %385 = vmatprep.subr.mxu0 0.0
        %386 = vmatpush2.msra.mxu0 0.0
        %387 = vmatprep.subr.mxu0 0.0
        %388 = vmatpush2.msra.mxu0 0.0
        %389 = vmatprep.subr.mxu0 0.0
        %390 = vmatpush2.msra.mxu0 0.0
        %391 = vmatprep.subr.mxu0 0.0
        %392 = vmatpush2.msra.mxu0 0.0
        %393 = vmatprep.subr.mxu0 0.0
        %394 = vmatpush2.msra.mxu0 0.0
        %395 = vmatprep.subr.mxu0 0.0
        %396 = vmatpush2.msra.mxu0 0.0
        %397 = vmatprep.subr.mxu0 0.0
        %398 = vmatpush2.msra.mxu0 0.0
        %399 = vmatprep.subr.mxu0 0.0
        %400 = vmatpush2.msra.mxu0 0.0
        %401 = vmatprep.subr.mxu0 0.0
        %402 = vmatpush2.msra.mxu0 0.0
        %403 = vmatprep.subr.mxu0 0.0
        %404 = vmatpush2.msra.mxu0 0.0
        %405 = vmatprep.subr.mxu0 0.0
        %406 = vmatpush2.msra.mxu0 0.0
        %407 = vmatprep.subr.mxu0 0.0
        %408 = vmatpush2.msra.mxu0 0.0
        %409 = vmatprep.subr.mxu0 0.0
        %410 = vmatpush2.msra.mxu0 0.0
        %411 = vmatprep.subr.mxu0 0.0
        %412 = vmatpush2.msra.mxu0 0.0
        %413 = vmatprep.subr.mxu0 0.0
        %414 = vmatpush2.msra.mxu0 0.0
        %415 = vmatprep.mubr.f32.mxu0 0.0
        %416 = vmatmul.mubr.f32.gmra.mxu0 %v253
        %v417 = vpop.f32.mrf.mxu0
        %v418 = vadd.f32 %v350, %v417
        %v419 = vpop.f32.mrf.mxu0
        %420 = vmatprep.mubr.f32.mxu0 0.0
        %421 = vmatmul.mubr.f32.gmra.mxu0 %v256
        %v422 = vpop.f32.mrf.mxu0
        %v423 = vadd.f32 %v350, %v422
        %v424 = vpop.f32.mrf.mxu0
        %425 = vdwg.mxu0
        %v426 = vmax.f32 %v418, 0.0
        %v427 = vmax.f32 %v423, 0.0
        %s428 = scalar_lea.vmem %s233, 16 [#allocation8]
        %429 = vst.msk [vmem:[%s428] sm:$0xff] %vm251, %v426
        %430 = vst.msk [vmem:[%s428 + $0x8] sm:$0xff] %vm251, %v427
        %s431 = scalar_lea.vmem [#allocation5], 128
        %v432 = vld [vmem:[%s431] sm:$0xff]
        %v433 = vld [vmem:[%s431 + $0x8] sm:$0xff]
        %v434 = vld [vmem:[%s431 + $0x10] sm:$0xff]
        %v435 = vld [vmem:[%s431 + $0x18] sm:$0xff]
        %v436 = vld [vmem:[%s431 + $0x20] sm:$0xff]
        %v437 = vld [vmem:[%s431 + $0x28] sm:$0xff]
        %v438 = vld [vmem:[%s431 + $0x30] sm:$0xff]
        %v439 = vld [vmem:[%s431 + $0x38] sm:$0xff]
        %v440 = vld [vmem:[#allocation7 + $0x2] sm:$0x1]
        %v441 = vlaneseq
        %v442 = vshrl.u32 %v441, 7
        %v443 = vsub.s32 0, %v442
        %v444 = vrot.slane %v440, %v443
        %445 = vmatprep.subr.mxu0 0.0
        %446 = vmatpush1.msra.mxu0 0.0
        %447 = vmatprep.subr.mxu0 0.0
        %448 = vmatpush1.msra.mxu0 0.0
        %449 = vmatprep.subr.mxu0 0.0
        %450 = vmatpush1.msra.mxu0 0.0
        %451 = vmatprep.subr.mxu0 0.0
        %452 = vmatpush1.msra.mxu0 0.0
        %453 = vmatprep.subr.mxu0 0.0
        %454 = vmatpush1.msra.mxu0 0.0
        %455 = vmatprep.subr.mxu0 0.0
        %456 = vmatpush1.msra.mxu0 0.0
        %457 = vmatprep.subr.mxu0 0.0
        %458 = vmatpush1.msra.mxu0 0.0
        %459 = vmatprep.subr.mxu0 0.0
        %460 = vmatpush1.msra.mxu0 0.0
        %461 = vmatprep.subr.mxu0 0.0
        %462 = vmatpush1.msra.mxu0 %v439
        %463 = vmatprep.subr.mxu0 0.0
        %464 = vmatpush1.msra.mxu0 %v438
        %465 = vmatprep.subr.mxu0 0.0
        %466 = vmatpush1.msra.mxu0 %v437
        %467 = vmatprep.subr.mxu0 0.0
        %468 = vmatpush1.msra.mxu0 %v436
        %469 = vmatprep.subr.mxu0 0.0
        %470 = vmatpush1.msra.mxu0 %v435
        %471 = vmatprep.subr.mxu0 0.0
        %472 = vmatpush1.msra.mxu0 %v434
        %473 = vmatprep.subr.mxu0 0.0
        %474 = vmatpush1.msra.mxu0 %v433
        %475 = vmatprep.subr.mxu0 0.0
        %476 = vmatpush1.msra.mxu0 %v432
        %477 = vmatprep.subr.mxu0 0.0
        %478 = vmatpush2.msra.mxu0 0.0
        %479 = vmatprep.subr.mxu0 0.0
        %480 = vmatpush2.msra.mxu0 0.0
        %481 = vmatprep.subr.mxu0 0.0
        %482 = vmatpush2.msra.mxu0 0.0
        %483 = vmatprep.subr.mxu0 0.0
        %484 = vmatpush2.msra.mxu0 0.0
        %485 = vmatprep.subr.mxu0 0.0
        %486 = vmatpush2.msra.mxu0 0.0
        %487 = vmatprep.subr.mxu0 0.0
        %488 = vmatpush2.msra.mxu0 0.0
        %489 = vmatprep.subr.mxu0 0.0
        %490 = vmatpush2.msra.mxu0 0.0
        %491 = vmatprep.subr.mxu0 0.0
        %492 = vmatpush2.msra.mxu0 0.0
        %493 = vmatprep.subr.mxu0 0.0
        %494 = vmatpush2.msra.mxu0 0.0
        %495 = vmatprep.subr.mxu0 0.0
        %496 = vmatpush2.msra.mxu0 0.0
        %497 = vmatprep.subr.mxu0 0.0
        %498 = vmatpush2.msra.mxu0 0.0
        %499 = vmatprep.subr.mxu0 0.0
        %500 = vmatpush2.msra.mxu0 0.0
        %501 = vmatprep.subr.mxu0 0.0
        %502 = vmatpush2.msra.mxu0 0.0
        %503 = vmatprep.subr.mxu0 0.0
        %504 = vmatpush2.msra.mxu0 0.0
        %505 = vmatprep.subr.mxu0 0.0
        %506 = vmatpush2.msra.mxu0 0.0
        %507 = vmatprep.subr.mxu0 0.0
        %508 = vmatpush2.msra.mxu0 0.0
        %509 = vmatprep.mubr.f32.mxu0 0.0
        %510 = vmatmul.mubr.f32.gmra.mxu0 %v253
        %v511 = vpop.f32.mrf.mxu0
        %v512 = vadd.f32 %v444, %v511
        %v513 = vpop.f32.mrf.mxu0
        %514 = vmatprep.mubr.f32.mxu0 0.0
        %515 = vmatmul.mubr.f32.gmra.mxu0 %v256
        %v516 = vpop.f32.mrf.mxu0
        %v517 = vadd.f32 %v444, %v516
        %v518 = vpop.f32.mrf.mxu0
        %519 = vdwg.mxu0
        %v520 = vmax.f32 %v512, 0.0
        %v521 = vmax.f32 %v517, 0.0
        %s522 = scalar_lea.vmem %s233, 32 [#allocation8]
        %523 = vst.msk [vmem:[%s522] sm:$0xff] %vm251, %v520
        %524 = vst.msk [vmem:[%s522 + $0x8] sm:$0xff] %vm251, %v521
        %s525 = scalar_lea.vmem [#allocation5], 192
        %v526 = vld [vmem:[%s525] sm:$0xff]
        %v527 = vld [vmem:[%s525 + $0x8] sm:$0xff]
        %v528 = vld [vmem:[%s525 + $0x10] sm:$0xff]
        %v529 = vld [vmem:[%s525 + $0x18] sm:$0xff]
        %v530 = vld [vmem:[%s525 + $0x20] sm:$0xff]
        %v531 = vld [vmem:[%s525 + $0x28] sm:$0xff]
        %v532 = vld [vmem:[%s525 + $0x30] sm:$0xff]
        %v533 = vld [vmem:[%s525 + $0x38] sm:$0xff]
        %v534 = vld [vmem:[#allocation7 + $0x3] sm:$0x1]
        %v535 = vlaneseq
        %v536 = vshrl.u32 %v535, 7
        %v537 = vsub.s32 0, %v536
        %v538 = vrot.slane %v534, %v537
        %539 = vmatprep.subr.mxu0 0.0
        %540 = vmatpush1.msra.mxu0 0.0
        %541 = vmatprep.subr.mxu0 0.0
        %542 = vmatpush1.msra.mxu0 0.0
        %543 = vmatprep.subr.mxu0 0.0
        %544 = vmatpush1.msra.mxu0 0.0
        %545 = vmatprep.subr.mxu0 0.0
        %546 = vmatpush1.msra.mxu0 0.0
        %547 = vmatprep.subr.mxu0 0.0
        %548 = vmatpush1.msra.mxu0 0.0
        %549 = vmatprep.subr.mxu0 0.0
        %550 = vmatpush1.msra.mxu0 0.0
        %551 = vmatprep.subr.mxu0 0.0
        %552 = vmatpush1.msra.mxu0 0.0
        %553 = vmatprep.subr.mxu0 0.0
        %554 = vmatpush1.msra.mxu0 0.0
        %555 = vmatprep.subr.mxu0 0.0
        %556 = vmatpush1.msra.mxu0 %v533
        %557 = vmatprep.subr.mxu0 0.0
        %558 = vmatpush1.msra.mxu0 %v532
        %559 = vmatprep.subr.mxu0 0.0
        %560 = vmatpush1.msra.mxu0 %v531
        %561 = vmatprep.subr.mxu0 0.0
        %562 = vmatpush1.msra.mxu0 %v530
        %563 = vmatprep.subr.mxu0 0.0
        %564 = vmatpush1.msra.mxu0 %v529
        %565 = vmatprep.subr.mxu0 0.0
        %566 = vmatpush1.msra.mxu0 %v528
        %567 = vmatprep.subr.mxu0 0.0
        %568 = vmatpush1.msra.mxu0 %v527
        %569 = vmatprep.subr.mxu0 0.0
        %570 = vmatpush1.msra.mxu0 %v526
        %571 = vmatprep.subr.mxu0 0.0
        %572 = vmatpush2.msra.mxu0 0.0
        %573 = vmatprep.subr.mxu0 0.0
        %574 = vmatpush2.msra.mxu0 0.0
        %575 = vmatprep.subr.mxu0 0.0
        %576 = vmatpush2.msra.mxu0 0.0
        %577 = vmatprep.subr.mxu0 0.0
        %578 = vmatpush2.msra.mxu0 0.0
        %579 = vmatprep.subr.mxu0 0.0
        %580 = vmatpush2.msra.mxu0 0.0
        %581 = vmatprep.subr.mxu0 0.0
        %582 = vmatpush2.msra.mxu0 0.0
        %583 = vmatprep.subr.mxu0 0.0
        %584 = vmatpush2.msra.mxu0 0.0
        %585 = vmatprep.subr.mxu0 0.0
        %586 = vmatpush2.msra.mxu0 0.0
        %587 = vmatprep.subr.mxu0 0.0
        %588 = vmatpush2.msra.mxu0 0.0
        %589 = vmatprep.subr.mxu0 0.0
        %590 = vmatpush2.msra.mxu0 0.0
        %591 = vmatprep.subr.mxu0 0.0
        %592 = vmatpush2.msra.mxu0 0.0
        %593 = vmatprep.subr.mxu0 0.0
        %594 = vmatpush2.msra.mxu0 0.0
        %595 = vmatprep.subr.mxu0 0.0
        %596 = vmatpush2.msra.mxu0 0.0
        %597 = vmatprep.subr.mxu0 0.0
        %598 = vmatpush2.msra.mxu0 0.0
        %599 = vmatprep.subr.mxu0 0.0
        %600 = vmatpush2.msra.mxu0 0.0
        %601 = vmatprep.subr.mxu0 0.0
        %602 = vmatpush2.msra.mxu0 0.0
        %603 = vmatprep.mubr.f32.mxu0 0.0
        %604 = vmatmul.mubr.f32.gmra.mxu0 %v253
        %v605 = vpop.f32.mrf.mxu0
        %v606 = vadd.f32 %v538, %v605
        %v607 = vpop.f32.mrf.mxu0
        %608 = vmatprep.mubr.f32.mxu0 0.0
        %609 = vmatmul.mubr.f32.gmra.mxu0 %v256
        %v610 = vpop.f32.mrf.mxu0
        %v611 = vadd.f32 %v538, %v610
        %v612 = vpop.f32.mrf.mxu0
        %613 = vdwg.mxu0
        %v614 = vmax.f32 %v606, 0.0
        %v615 = vmax.f32 %v611, 0.0
        %s616 = scalar_lea.vmem %s233, 48 [#allocation8]
        %617 = vst.msk [vmem:[%s616] sm:$0xff] %vm251, %v614
        %618 = vst.msk [vmem:[%s616 + $0x8] sm:$0xff] %vm251, %v615
        %s619 = scalar_lea.vmem [#allocation5], 256
        %v620 = vld [vmem:[%s619] sm:$0xff]
        %v621 = vld [vmem:[%s619 + $0x8] sm:$0xff]
        %v622 = vld [vmem:[%s619 + $0x10] sm:$0xff]
        %v623 = vld [vmem:[%s619 + $0x18] sm:$0xff]
        %v624 = vld [vmem:[%s619 + $0x20] sm:$0xff]
        %v625 = vld [vmem:[%s619 + $0x28] sm:$0xff]
        %v626 = vld [vmem:[%s619 + $0x30] sm:$0xff]
        %v627 = vld [vmem:[%s619 + $0x38] sm:$0xff]
        %v628 = vld [vmem:[#allocation7 + $0x4] sm:$0x1]
        %v629 = vlaneseq
        %v630 = vshrl.u32 %v629, 7
        %v631 = vsub.s32 0, %v630
        %v632 = vrot.slane %v628, %v631
        %633 = vmatprep.subr.mxu0 0.0
        %634 = vmatpush1.msra.mxu0 0.0
        %635 = vmatprep.subr.mxu0 0.0
        %636 = vmatpush1.msra.mxu0 0.0
        %637 = vmatprep.subr.mxu0 0.0
        %638 = vmatpush1.msra.mxu0 0.0
        %639 = vmatprep.subr.mxu0 0.0
        %640 = vmatpush1.msra.mxu0 0.0
        %641 = vmatprep.subr.mxu0 0.0
        %642 = vmatpush1.msra.mxu0 0.0
        %643 = vmatprep.subr.mxu0 0.0
        %644 = vmatpush1.msra.mxu0 0.0
        %645 = vmatprep.subr.mxu0 0.0
        %646 = vmatpush1.msra.mxu0 0.0
        %647 = vmatprep.subr.mxu0 0.0
        %648 = vmatpush1.msra.mxu0 0.0
        %649 = vmatprep.subr.mxu0 0.0
        %650 = vmatpush1.msra.mxu0 %v627
        %651 = vmatprep.subr.mxu0 0.0
        %652 = vmatpush1.msra.mxu0 %v626
        %653 = vmatprep.subr.mxu0 0.0
        %654 = vmatpush1.msra.mxu0 %v625
        %655 = vmatprep.subr.mxu0 0.0
        %656 = vmatpush1.msra.mxu0 %v624
        %657 = vmatprep.subr.mxu0 0.0
        %658 = vmatpush1.msra.mxu0 %v623
        %659 = vmatprep.subr.mxu0 0.0
        %660 = vmatpush1.msra.mxu0 %v622
        %661 = vmatprep.subr.mxu0 0.0
        %662 = vmatpush1.msra.mxu0 %v621
        %663 = vmatprep.subr.mxu0 0.0
        %664 = vmatpush1.msra.mxu0 %v620
        %665 = vmatprep.subr.mxu0 0.0
        %666 = vmatpush2.msra.mxu0 0.0
        %667 = vmatprep.subr.mxu0 0.0
        %668 = vmatpush2.msra.mxu0 0.0
        %669 = vmatprep.subr.mxu0 0.0
        %670 = vmatpush2.msra.mxu0 0.0
        %671 = vmatprep.subr.mxu0 0.0
        %672 = vmatpush2.msra.mxu0 0.0
        %673 = vmatprep.subr.mxu0 0.0
        %674 = vmatpush2.msra.mxu0 0.0
        %675 = vmatprep.subr.mxu0 0.0
        %676 = vmatpush2.msra.mxu0 0.0
        %677 = vmatprep.subr.mxu0 0.0
        %678 = vmatpush2.msra.mxu0 0.0
        %679 = vmatprep.subr.mxu0 0.0
        %680 = vmatpush2.msra.mxu0 0.0
        %681 = vmatprep.subr.mxu0 0.0
        %682 = vmatpush2.msra.mxu0 0.0
        %683 = vmatprep.subr.mxu0 0.0
        %684 = vmatpush2.msra.mxu0 0.0
        %685 = vmatprep.subr.mxu0 0.0
        %686 = vmatpush2.msra.mxu0 0.0
        %687 = vmatprep.subr.mxu0 0.0
        %688 = vmatpush2.msra.mxu0 0.0
        %689 = vmatprep.subr.mxu0 0.0
        %690 = vmatpush2.msra.mxu0 0.0
        %691 = vmatprep.subr.mxu0 0.0
        %692 = vmatpush2.msra.mxu0 0.0
        %693 = vmatprep.subr.mxu0 0.0
        %694 = vmatpush2.msra.mxu0 0.0
        %695 = vmatprep.subr.mxu0 0.0
        %696 = vmatpush2.msra.mxu0 0.0
        %697 = vmatprep.mubr.f32.mxu0 0.0
        %698 = vmatmul.mubr.f32.gmra.mxu0 %v253
        %v699 = vpop.f32.mrf.mxu0
        %v700 = vadd.f32 %v632, %v699
        %v701 = vpop.f32.mrf.mxu0
        %702 = vmatprep.mubr.f32.mxu0 0.0
        %703 = vmatmul.mubr.f32.gmra.mxu0 %v256
        %v704 = vpop.f32.mrf.mxu0
        %v705 = vadd.f32 %v632, %v704
        %v706 = vpop.f32.mrf.mxu0
        %707 = vdwg.mxu0
        %v708 = vmax.f32 %v700, 0.0
        %v709 = vmax.f32 %v705, 0.0
        %s710 = scalar_lea.vmem %s233, 64 [#allocation8]
        %711 = vst.msk [vmem:[%s710] sm:$0xff] %vm251, %v708
        %712 = vst.msk [vmem:[%s710 + $0x8] sm:$0xff] %vm251, %v709
        %s713 = scalar_lea.vmem [#allocation5], 320
        %v714 = vld [vmem:[%s713] sm:$0xff]
        %v715 = vld [vmem:[%s713 + $0x8] sm:$0xff]
        %v716 = vld [vmem:[%s713 + $0x10] sm:$0xff]
        %v717 = vld [vmem:[%s713 + $0x18] sm:$0xff]
        %v718 = vld [vmem:[%s713 + $0x20] sm:$0xff]
        %v719 = vld [vmem:[%s713 + $0x28] sm:$0xff]
        %v720 = vld [vmem:[%s713 + $0x30] sm:$0xff]
        %v721 = vld [vmem:[%s713 + $0x38] sm:$0xff]
        %v722 = vld [vmem:[#allocation7 + $0x5] sm:$0x1]
        %v723 = vlaneseq
        %v724 = vshrl.u32 %v723, 7
        %v725 = vsub.s32 0, %v724
        %v726 = vrot.slane %v722, %v725
        %727 = vmatprep.subr.mxu0 0.0
        %728 = vmatpush1.msra.mxu0 0.0
        %729 = vmatprep.subr.mxu0 0.0
        %730 = vmatpush1.msra.mxu0 0.0
        %731 = vmatprep.subr.mxu0 0.0
        %732 = vmatpush1.msra.mxu0 0.0
        %733 = vmatprep.subr.mxu0 0.0
        %734 = vmatpush1.msra.mxu0 0.0
        %735 = vmatprep.subr.mxu0 0.0
        %736 = vmatpush1.msra.mxu0 0.0
        %737 = vmatprep.subr.mxu0 0.0
        %738 = vmatpush1.msra.mxu0 0.0
        %739 = vmatprep.subr.mxu0 0.0
        %740 = vmatpush1.msra.mxu0 0.0
        %741 = vmatprep.subr.mxu0 0.0
        %742 = vmatpush1.msra.mxu0 0.0
        %743 = vmatprep.subr.mxu0 0.0
        %744 = vmatpush1.msra.mxu0 %v721
        %745 = vmatprep.subr.mxu0 0.0
        %746 = vmatpush1.msra.mxu0 %v720
        %747 = vmatprep.subr.mxu0 0.0
        %748 = vmatpush1.msra.mxu0 %v719
        %749 = vmatprep.subr.mxu0 0.0
        %750 = vmatpush1.msra.mxu0 %v718
        %751 = vmatprep.subr.mxu0 0.0
        %752 = vmatpush1.msra.mxu0 %v717
        %753 = vmatprep.subr.mxu0 0.0
        %754 = vmatpush1.msra.mxu0 %v716
        %755 = vmatprep.subr.mxu0 0.0
        %756 = vmatpush1.msra.mxu0 %v715
        %757 = vmatprep.subr.mxu0 0.0
        %758 = vmatpush1.msra.mxu0 %v714
        %759 = vmatprep.subr.mxu0 0.0
        %760 = vmatpush2.msra.mxu0 0.0
        %761 = vmatprep.subr.mxu0 0.0
        %762 = vmatpush2.msra.mxu0 0.0
        %763 = vmatprep.subr.mxu0 0.0
        %764 = vmatpush2.msra.mxu0 0.0
        %765 = vmatprep.subr.mxu0 0.0
        %766 = vmatpush2.msra.mxu0 0.0
        %767 = vmatprep.subr.mxu0 0.0
        %768 = vmatpush2.msra.mxu0 0.0
        %769 = vmatprep.subr.mxu0 0.0
        %770 = vmatpush2.msra.mxu0 0.0
        %771 = vmatprep.subr.mxu0 0.0
        %772 = vmatpush2.msra.mxu0 0.0
        %773 = vmatprep.subr.mxu0 0.0
        %774 = vmatpush2.msra.mxu0 0.0
        %775 = vmatprep.subr.mxu0 0.0
        %776 = vmatpush2.msra.mxu0 0.0
        %777 = vmatprep.subr.mxu0 0.0
        %778 = vmatpush2.msra.mxu0 0.0
        %779 = vmatprep.subr.mxu0 0.0
        %780 = vmatpush2.msra.mxu0 0.0
        %781 = vmatprep.subr.mxu0 0.0
        %782 = vmatpush2.msra.mxu0 0.0
        %783 = vmatprep.subr.mxu0 0.0
        %784 = vmatpush2.msra.mxu0 0.0
        %785 = vmatprep.subr.mxu0 0.0
        %786 = vmatpush2.msra.mxu0 0.0
        %787 = vmatprep.subr.mxu0 0.0
        %788 = vmatpush2.msra.mxu0 0.0
        %789 = vmatprep.subr.mxu0 0.0
        %790 = vmatpush2.msra.mxu0 0.0
        %791 = vmatprep.mubr.f32.mxu0 0.0
        %792 = vmatmul.mubr.f32.gmra.mxu0 %v253
        %v793 = vpop.f32.mrf.mxu0
        %v794 = vadd.f32 %v726, %v793
        %v795 = vpop.f32.mrf.mxu0
        %796 = vmatprep.mubr.f32.mxu0 0.0
        %797 = vmatmul.mubr.f32.gmra.mxu0 %v256
        %v798 = vpop.f32.mrf.mxu0
        %v799 = vadd.f32 %v726, %v798
        %v800 = vpop.f32.mrf.mxu0
        %801 = vdwg.mxu0
        %v802 = vmax.f32 %v794, 0.0
        %v803 = vmax.f32 %v799, 0.0
        %s804 = scalar_lea.vmem %s233, 80 [#allocation8]
        %805 = vst.msk [vmem:[%s804] sm:$0xff] %vm251, %v802
        %806 = vst.msk [vmem:[%s804 + $0x8] sm:$0xff] %vm251, %v803
        %s807 = scalar_lea.vmem [#allocation5], 384
        %v808 = vld [vmem:[%s807] sm:$0xff]
        %v809 = vld [vmem:[%s807 + $0x8] sm:$0xff]
        %v810 = vld [vmem:[%s807 + $0x10] sm:$0xff]
        %v811 = vld [vmem:[%s807 + $0x18] sm:$0xff]
        %v812 = vld [vmem:[%s807 + $0x20] sm:$0xff]
        %v813 = vld [vmem:[%s807 + $0x28] sm:$0xff]
        %v814 = vld [vmem:[%s807 + $0x30] sm:$0xff]
        %v815 = vld [vmem:[%s807 + $0x38] sm:$0xff]
        %v816 = vld [vmem:[#allocation7 + $0x6] sm:$0x1]
        %v817 = vlaneseq
        %v818 = vshrl.u32 %v817, 7
        %v819 = vsub.s32 0, %v818
        %v820 = vrot.slane %v816, %v819
        %821 = vmatprep.subr.mxu0 0.0
        %822 = vmatpush1.msra.mxu0 0.0
        %823 = vmatprep.subr.mxu0 0.0
        %824 = vmatpush1.msra.mxu0 0.0
        %825 = vmatprep.subr.mxu0 0.0
        %826 = vmatpush1.msra.mxu0 0.0
        %827 = vmatprep.subr.mxu0 0.0
        %828 = vmatpush1.msra.mxu0 0.0
        %829 = vmatprep.subr.mxu0 0.0
        %830 = vmatpush1.msra.mxu0 0.0
        %831 = vmatprep.subr.mxu0 0.0
        %832 = vmatpush1.msra.mxu0 0.0
        %833 = vmatprep.subr.mxu0 0.0
        %834 = vmatpush1.msra.mxu0 0.0
        %835 = vmatprep.subr.mxu0 0.0
        %836 = vmatpush1.msra.mxu0 0.0
        %837 = vmatprep.subr.mxu0 0.0
        %838 = vmatpush1.msra.mxu0 %v815
        %839 = vmatprep.subr.mxu0 0.0
        %840 = vmatpush1.msra.mxu0 %v814
        %841 = vmatprep.subr.mxu0 0.0
        %842 = vmatpush1.msra.mxu0 %v813
        %843 = vmatprep.subr.mxu0 0.0
        %844 = vmatpush1.msra.mxu0 %v812
        %845 = vmatprep.subr.mxu0 0.0
        %846 = vmatpush1.msra.mxu0 %v811
        %847 = vmatprep.subr.mxu0 0.0
        %848 = vmatpush1.msra.mxu0 %v810
        %849 = vmatprep.subr.mxu0 0.0
        %850 = vmatpush1.msra.mxu0 %v809
        %851 = vmatprep.subr.mxu0 0.0
        %852 = vmatpush1.msra.mxu0 %v808
        %853 = vmatprep.subr.mxu0 0.0
        %854 = vmatpush2.msra.mxu0 0.0
        %855 = vmatprep.subr.mxu0 0.0
        %856 = vmatpush2.msra.mxu0 0.0
        %857 = vmatprep.subr.mxu0 0.0
        %858 = vmatpush2.msra.mxu0 0.0
        %859 = vmatprep.subr.mxu0 0.0
        %860 = vmatpush2.msra.mxu0 0.0
        %861 = vmatprep.subr.mxu0 0.0
        %862 = vmatpush2.msra.mxu0 0.0
        %863 = vmatprep.subr.mxu0 0.0
        %864 = vmatpush2.msra.mxu0 0.0
        %865 = vmatprep.subr.mxu0 0.0
        %866 = vmatpush2.msra.mxu0 0.0
        %867 = vmatprep.subr.mxu0 0.0
        %868 = vmatpush2.msra.mxu0 0.0
        %869 = vmatprep.subr.mxu0 0.0
        %870 = vmatpush2.msra.mxu0 0.0
        %871 = vmatprep.subr.mxu0 0.0
        %872 = vmatpush2.msra.mxu0 0.0
        %873 = vmatprep.subr.mxu0 0.0
        %874 = vmatpush2.msra.mxu0 0.0
        %875 = vmatprep.subr.mxu0 0.0
        %876 = vmatpush2.msra.mxu0 0.0
        %877 = vmatprep.subr.mxu0 0.0
        %878 = vmatpush2.msra.mxu0 0.0
        %879 = vmatprep.subr.mxu0 0.0
        %880 = vmatpush2.msra.mxu0 0.0
        %881 = vmatprep.subr.mxu0 0.0
        %882 = vmatpush2.msra.mxu0 0.0
        %883 = vmatprep.subr.mxu0 0.0
        %884 = vmatpush2.msra.mxu0 0.0
        %885 = vmatprep.mubr.f32.mxu0 0.0
        %886 = vmatmul.mubr.f32.gmra.mxu0 %v253
        %v887 = vpop.f32.mrf.mxu0
        %v888 = vadd.f32 %v820, %v887
        %v889 = vpop.f32.mrf.mxu0
        %890 = vmatprep.mubr.f32.mxu0 0.0
        %891 = vmatmul.mubr.f32.gmra.mxu0 %v256
        %v892 = vpop.f32.mrf.mxu0
        %v893 = vadd.f32 %v820, %v892
        %v894 = vpop.f32.mrf.mxu0
        %895 = vdwg.mxu0
        %v896 = vmax.f32 %v888, 0.0
        %v897 = vmax.f32 %v893, 0.0
        %s898 = scalar_lea.vmem %s233, 96 [#allocation8]
        %899 = vst.msk [vmem:[%s898] sm:$0xff] %vm251, %v896
        %900 = vst.msk [vmem:[%s898 + $0x8] sm:$0xff] %vm251, %v897
        %s901 = scalar_lea.vmem [#allocation5], 448
        %v902 = vld [vmem:[%s901] sm:$0xff]
        %v903 = vld [vmem:[%s901 + $0x8] sm:$0xff]
        %v904 = vld [vmem:[%s901 + $0x10] sm:$0xff]
        %v905 = vld [vmem:[%s901 + $0x18] sm:$0xff]
        %v906 = vld [vmem:[%s901 + $0x20] sm:$0xff]
        %v907 = vld [vmem:[%s901 + $0x28] sm:$0xff]
        %v908 = vld [vmem:[%s901 + $0x30] sm:$0xff]
        %v909 = vld [vmem:[%s901 + $0x38] sm:$0xff]
        %v910 = vld [vmem:[#allocation7 + $0x7] sm:$0x1]
        %v911 = vlaneseq
        %v912 = vshrl.u32 %v911, 7
        %v913 = vsub.s32 0, %v912
        %v914 = vrot.slane %v910, %v913
        %915 = vmatprep.subr.mxu0 0.0
        %916 = vmatpush1.msra.mxu0 0.0
        %917 = vmatprep.subr.mxu0 0.0
        %918 = vmatpush1.msra.mxu0 0.0
        %919 = vmatprep.subr.mxu0 0.0
        %920 = vmatpush1.msra.mxu0 0.0
        %921 = vmatprep.subr.mxu0 0.0
        %922 = vmatpush1.msra.mxu0 0.0
        %923 = vmatprep.subr.mxu0 0.0
        %924 = vmatpush1.msra.mxu0 0.0
        %925 = vmatprep.subr.mxu0 0.0
        %926 = vmatpush1.msra.mxu0 0.0
        %927 = vmatprep.subr.mxu0 0.0
        %928 = vmatpush1.msra.mxu0 0.0
        %929 = vmatprep.subr.mxu0 0.0
        %930 = vmatpush1.msra.mxu0 0.0
        %931 = vmatprep.subr.mxu0 0.0
        %932 = vmatpush1.msra.mxu0 %v909
        %933 = vmatprep.subr.mxu0 0.0
        %934 = vmatpush1.msra.mxu0 %v908
        %935 = vmatprep.subr.mxu0 0.0
        %936 = vmatpush1.msra.mxu0 %v907
        %937 = vmatprep.subr.mxu0 0.0
        %938 = vmatpush1.msra.mxu0 %v906
        %939 = vmatprep.subr.mxu0 0.0
        %940 = vmatpush1.msra.mxu0 %v905
        %941 = vmatprep.subr.mxu0 0.0
        %942 = vmatpush1.msra.mxu0 %v904
        %943 = vmatprep.subr.mxu0 0.0
        %944 = vmatpush1.msra.mxu0 %v903
        %945 = vmatprep.subr.mxu0 0.0
        %946 = vmatpush1.msra.mxu0 %v902
        %947 = vmatprep.subr.mxu0 0.0
        %948 = vmatpush2.msra.mxu0 0.0
        %949 = vmatprep.subr.mxu0 0.0
        %950 = vmatpush2.msra.mxu0 0.0
        %951 = vmatprep.subr.mxu0 0.0
        %952 = vmatpush2.msra.mxu0 0.0
        %953 = vmatprep.subr.mxu0 0.0
        %954 = vmatpush2.msra.mxu0 0.0
        %955 = vmatprep.subr.mxu0 0.0
        %956 = vmatpush2.msra.mxu0 0.0
        %957 = vmatprep.subr.mxu0 0.0
        %958 = vmatpush2.msra.mxu0 0.0
        %959 = vmatprep.subr.mxu0 0.0
        %960 = vmatpush2.msra.mxu0 0.0
        %961 = vmatprep.subr.mxu0 0.0
        %962 = vmatpush2.msra.mxu0 0.0
        %963 = vmatprep.subr.mxu0 0.0
        %964 = vmatpush2.msra.mxu0 0.0
        %965 = vmatprep.subr.mxu0 0.0
        %966 = vmatpush2.msra.mxu0 0.0
        %967 = vmatprep.subr.mxu0 0.0
        %968 = vmatpush2.msra.mxu0 0.0
        %969 = vmatprep.subr.mxu0 0.0
        %970 = vmatpush2.msra.mxu0 0.0
        %971 = vmatprep.subr.mxu0 0.0
        %972 = vmatpush2.msra.mxu0 0.0
        %973 = vmatprep.subr.mxu0 0.0
        %974 = vmatpush2.msra.mxu0 0.0
        %975 = vmatprep.subr.mxu0 0.0
        %976 = vmatpush2.msra.mxu0 0.0
        %977 = vmatprep.subr.mxu0 0.0
        %978 = vmatpush2.msra.mxu0 0.0
        %979 = vmatprep.mubr.f32.mxu0 0.0
        %980 = vmatmul.mubr.f32.gmra.mxu0 %v253
        %v981 = vpop.f32.mrf.mxu0
        %v982 = vadd.f32 %v914, %v981
        %v983 = vpop.f32.mrf.mxu0
        %984 = vmatprep.mubr.f32.mxu0 0.0
        %985 = vmatmul.mubr.f32.gmra.mxu0 %v256
        %v986 = vpop.f32.mrf.mxu0
        %v987 = vadd.f32 %v914, %v986
        %v988 = vpop.f32.mrf.mxu0
        %989 = vdwg.mxu0
        %v990 = vmax.f32 %v982, 0.0
        %v991 = vmax.f32 %v987, 0.0
        %s992 = scalar_lea.vmem %s233, 112 [#allocation8]
        %993 = vst.msk [vmem:[%s992] sm:$0xff] %vm251, %v990
        %994 = vst.msk [vmem:[%s992 + $0x8] sm:$0xff] %vm251, %v991
        %s995 = sand.u32 %s113, 1
        %s996 = scalar_lea.sflag [#allocation4], %s995
        %s997 = sand.u32 %s113, 1
        %s998 = smul.addr %s997, 128
        %s999 = scalar_lea.vmem [#allocation8], %s998
        // Predicated region
        $region45: #{tpu_custom_call.1} parent=31 // pred_check
          %p1000 = pneg %p123
        $region46: #{tpu_custom_call.1} parent=31 // pred_check_branch
          %1002 = sbr.rel (%p1000) target = $region48
        $region47: #{tpu_custom_call.1} parent=31 // pred_region
          %s1003 = smul.u32 2, %s26
          %s1005 = ssub.s32 2048, 2048
          %1006 = vsyncadd %s996, %s1005
          %s1007 = smul.addr %s25, 16
          %s1008 = sadd.s32 %s1003, %s1007
          %s1009 = smul.addr %s1008, 128
          %s1010 = scalar_lea.hbm %s3, %s1009
          %s1011 = sshll.u32 %s999, 4
          %s1012 = int_to_ptr.vmem [resolvable:$true] %s1011
          %1017 = dma.vmem_to_hbm [thread:$0]  %s1012, 2048, %s1010, %s996, 128, 128, 8
        $region48: #{tpu_custom_call.1} parent=31 // pred_fallthru
          _
      $region32: #{tpu_custom_call.1} parent=5 // pred_fallthru
        _
      %p1018 = scmp.le.s32.totalorder 2, %s16
      // Predicated region
      $region49: #{tpu_custom_call.1} parent=5 // pred_check
        %p1019 = pneg %p1018
      $region50: #{tpu_custom_call.1} parent=5 // pred_check_branch
        %1021 = sbr.rel (%p1019) target = $region52
      $region51: #{tpu_custom_call.1} parent=5 // pred_region
        %s1022 = ssub.s32 %s16, 2
        // Predicated region
        $region53: #{tpu_custom_call.1} parent=51 // pred_check
          %p1023 = pneg %p129
        $region54: #{tpu_custom_call.1} parent=51 // pred_check_branch
          %1025 = sbr.rel (%p1023) target = $region56
        $region55: #{tpu_custom_call.1} parent=51 // pred_region
          %s1026 = sand.u32 %s114, 1
          %s1027 = scalar_lea.sflag [#allocation4], %s1026
          %s1028 = sand.u32 %s114, 1
          %s1029 = smul.addr %s1028, 128
          %s1030 = scalar_lea.vmem [#allocation8], %s1029
          %1031 = dma.done %s1027, 2048
        $region56: #{tpu_custom_call.1} parent=51 // pred_fallthru
          _
      $region52: #{tpu_custom_call.1} parent=5 // pred_fallthru
        _
    $region6: #{tpu_custom_call.1} parent=1 // loop_footer
      %s20 = sadd.s32 1, %s16
    $region7: #{tpu_custom_call.1} parent=1 // loop_footer_branch
      %15 = sbr.rel target = $region3
    $region8: #{tpu_custom_call.1} parent=1 // loop_exit
      _
    %1032 = vsyncpa [#allocation3], 1
    %s1033 = scalar_lea.sflag [#allocation3], 1
    %1034 = vsyncpa %s1033, 1
    %1035 = vsyncpa [#allocation6], 1
    %1036 = vsyncpa [#allocation4], 1
    %s1037 = scalar_lea.sflag [#allocation4], 1
    %1038 = vsyncpa %s1037, 1

</llo_original>
